<compile_context>
chip_gen: v5e
topology: v5e:2x2
jax: 0.10.0
libtpu: 0.0.40
codegen_flags: <defaults>
</compile_context>

<pallas_src>
import jax
import jax.numpy as jnp
from jax import lax
from jax.experimental import pallas as pl
from jax.experimental.pallas import tpu as pltpu

_NEG = -1e30   # "minus infinity" for masked logits (safe under exp / max)


def _round_up(x, m):
    return ((x + m - 1) // m) * m


# ---------------------------------------------------------------------------
# Generation path: (1 - p_copy) * softmax(logits with PAD column set to -eps)
# ---------------------------------------------------------------------------
def _make_gen_kernel(vocab_size, pad_index, eps):
    def gen_kernel(x_ref, w_ref, b_ref, wc_ref, bc_ref, out_ref,
                   m_sc, l_sc, g_sc):
        p = pl.program_id(1)           # 0 = stats pass, 1 = emit pass
        v = pl.program_id(2)           # vocab tile index
        tv = w_ref.shape[1]

        x = x_ref[...]                                            # (TR, D) bf16
        col = lax.broadcasted_iota(jnp.int32, (1, tv), 1) + v * tv

        # logit tile, f32 accumulation on the MXU
        logits = jnp.dot(x, w_ref[...],
                         preferred_element_type=jnp.float32) + b_ref[...]
        # PAD column -> -eps (exactly what the PyTorch module does),
        # padded vocab columns -> -inf-ish so they vanish from the softmax.
        logits = jnp.where(col == pad_index, jnp.float32(-eps), logits)
        logits = jnp.where(col < vocab_size, logits, jnp.float32(_NEG))

        @pl.when(jnp.logical_and(p == 0, v == 0))
        def _init():
            m_sc[...] = jnp.full(m_sc.shape, _NEG, jnp.float32)
            l_sc[...] = jnp.zeros(l_sc.shape, jnp.float32)
            # copy gate: sigmoid(x @ w_copy + b_copy), done on the MXU.
            gd = jnp.dot(x, wc_ref[...], preferred_element_type=jnp.float32)
            g_sc[...] = jax.nn.sigmoid(gd[:, :1] + bc_ref[0, 0])

        @pl.when(p == 0)
        def _stats():
            m_old = m_sc[...]
            m_new = jnp.maximum(m_old, jnp.max(logits, axis=-1, keepdims=True))
            l_sc[...] = (l_sc[...] * jnp.exp(m_old - m_new) +
                         jnp.sum(jnp.exp(logits - m_new), axis=-1,
                                 keepdims=True))
            m_sc[...] = m_new

        @pl.when(p == 1)
        def _emit():
            scale = (1.0 - g_sc[...]) / l_sc[...]                 # (TR, 1)
            out_ref[...] = (jnp.exp(logits - m_sc[...]) * scale
                            ).astype(out_ref.dtype)

    return gen_kernel


# ---------------------------------------------------------------------------
# Copy path:  (attn * p_copy) @ src_map   (per batch)
# ---------------------------------------------------------------------------
def _copy_kernel(x_ref, attn_ref, smap_ref, wc_ref, bc_ref, out_ref):
    x = x_ref[0]                                                  # (L, D) bf16
    gd = jnp.dot(x, wc_ref[...], preferred_element_type=jnp.float32)
    p_copy = jax.nn.sigmoid(gd[:, :1] + bc_ref[0, 0])             # (L, 1)
    mul_attn = (attn_ref[0] * p_copy).astype(jnp.bfloat16)        # (L, S)
    out_ref[0] = jnp.dot(mul_attn, smap_ref[0],
                         preferred_element_type=jnp.float32
                         ).astype(out_ref.dtype)


def copy_generator(hidden, attn, src_map, w_gen, b_gen, w_copy, b_copy,
                   *, pad_index=0, eps=1e-20, row_tile=128, v_tile=2048):
    """hidden (N,L,D) f32, attn (N,L,S) f32, src_map (N,S,C) f32,
    w_gen (V,D), b_gen (V,), w_copy (1,D), b_copy (1,).
    Returns the extended distribution (N, L, V + C) f32.
    row_tile: 128 is a safe default (v5e MXU aligned); 256 also fine on v6e/v7x.
    v_tile:   2048 keeps the working set well under v7x's 64 MiB VMEM."""
    N, L, D = hidden.shape
    S = attn.shape[2]
    C = src_map.shape[2]
    V = w_gen.shape[0]

    # -------------------- generation path ---------------------------------
    R = N * L
    row_tile = _round_up(row_tile, 16)            # bf16 sublane packing
    v_tile = _round_up(v_tile, 128)               # lane width
    tr = min(row_tile, _round_up(R, 16))
    rp = _round_up(R, tr)
    tv = min(v_tile, _round_up(V, 128))
    vp = _round_up(V, tv)

    x2d = hidden.reshape(R, D).astype(jnp.bfloat16)
    if rp != R:
        x2d = jnp.pad(x2d, ((0, rp - R), (0, 0)))
    w_gen_t = w_gen.T.astype(jnp.bfloat16)                       # (D, V)
    if vp != V:
        w_gen_t = jnp.pad(w_gen_t, ((0, 0), (0, vp - V)))
    b_gen_p = jnp.pad(b_gen.astype(jnp.float32), (0, vp - V)).reshape(1, vp)
    # copy-gate weight padded to a full 128-lane tile (column 0 is the real one)
    w_copy_c = jnp.pad(w_copy.reshape(D, 1), ((0, 0), (0, 127))
                       ).astype(jnp.bfloat16)                    # (D, 128)
    b_copy_s = b_copy.reshape(1, 1).astype(jnp.float32)          # SMEM scalar

    nr, nv = rp // tr, vp // tv
    smem_spec = pl.BlockSpec(memory_space=pltpu.MemorySpace.SMEM)

    gen_spec = pltpu.PrefetchScalarGridSpec(
        num_scalar_prefetch=0,
        grid=(nr, 2, nv),            # row tiles x {stats, emit} x vocab tiles
        in_specs=[
            pl.BlockSpec((tr, D), lambda r, p, v: (r, 0)),       # activations
            pl.BlockSpec((D, tv), lambda r, p, v: (0, v)),       # W_gen^T slice
            pl.BlockSpec((1, tv), lambda r, p, v: (0, v)),       # b_gen slice
            pl.BlockSpec((D, 128), lambda r, p, v: (0, 0)),      # w_copy column
            smem_spec,                                           # b_copy scalar
        ],
        # stats pass parks on tile (r, 0); emit pass writes tile (r, v).
        out_specs=pl.BlockSpec((tr, tv), lambda r, p, v: (r, v * p)),
        scratch_shapes=[pltpu.VMEM((tr, 1), jnp.float32),        # running max
                        pltpu.VMEM((tr, 1), jnp.float32),        # running sum
                        pltpu.VMEM((tr, 1), jnp.float32)],       # p_copy gate
    )
    out_prob_p = pl.pallas_call(
        _make_gen_kernel(V, pad_index, eps),
        out_shape=jax.ShapeDtypeStruct((rp, vp), jnp.float32),
        grid_spec=gen_spec,
        compiler_params=pltpu.CompilerParams(
            dimension_semantics=("parallel", "arbitrary", "arbitrary"),
            vmem_limit_bytes=32 * 1024 * 1024),
    )(x2d, w_gen_t, b_gen_p, w_copy_c, b_copy_s)
    out_prob = out_prob_p[:R, :V].reshape(N, L, V)

    # -------------------- copy path ----------------------------------------
    hidden_b = hidden.astype(jnp.bfloat16)
    smap_b = src_map.astype(jnp.bfloat16)
    copy_spec = pltpu.PrefetchScalarGridSpec(
        num_scalar_prefetch=0,
        grid=(N,),
        in_specs=[
            pl.BlockSpec((1, L, D), lambda n: (n, 0, 0)),
            pl.BlockSpec((1, L, S), lambda n: (n, 0, 0)),
            pl.BlockSpec((1, S, C), lambda n: (n, 0, 0)),
            pl.BlockSpec((D, 128), lambda n: (0, 0)),
            smem_spec,
        ],
        out_specs=pl.BlockSpec((1, L, C), lambda n: (n, 0, 0)),
    )
    copy_prob = pl.pallas_call(
        _copy_kernel,
        out_shape=jax.ShapeDtypeStruct((N, L, C), jnp.float32),
        grid_spec=copy_spec,
        compiler_params=pltpu.CompilerParams(
            dimension_semantics=("parallel",),
            vmem_limit_bytes=32 * 1024 * 1024),
    )(hidden_b, attn.astype(jnp.float32), smap_b, w_copy_c, b_copy_s)

    return jnp.concatenate([out_prob, copy_prob], axis=-1)


# ---------------------------------------------------------------------------
# Pure-JAX reference (mirrors the PyTorch forward)
# ---------------------------------------------------------------------------
def copy_generator_ref(hidden, attn, src_map, w_gen, b_gen, w_copy, b_copy,
                       *, pad_index=0, eps=1e-20, match_kernel_precision=True):
    cast = ((lambda a: a.astype(jnp.bfloat16)) if match_kernel_precision
            else (lambda a: a))
    xh = cast(hidden)
    logits = jnp.einsum("nld,vd->nlv", xh, cast(w_gen),
                        preferred_element_type=jnp.float32) + b_gen
    logits = logits.at[:, :, pad_index].set(-eps)
    prob = jax.nn.softmax(logits, axis=-1)
    p_copy = jax.nn.sigmoid(
        jnp.einsum("nld,kd->nlk", xh, cast(w_copy),
                   preferred_element_type=jnp.float32) + b_copy)
    out_prob = prob * (1.0 - p_copy)
    mul_attn = cast(attn * p_copy)
    copy_prob = jnp.einsum("nls,nsc->nlc", mul_attn, cast(src_map),
                           preferred_element_type=jnp.float32)
    return jnp.concatenate([out_prob, copy_prob], axis=-1)


if __name__ == "__main__":
    # Small shapes; V deliberately not a multiple of 128 and tiny tiles so the
    # multi-row-tile / multi-vocab-tile / padding-mask paths are all exercised.
    N, L, D, S, V, C = 2, 16, 32, 16, 200, 128
    PAD = 1

    key = jax.random.PRNGKey(0)
    k1, k2, k3, k4, k5, k6, k7 = jax.random.split(key, 7)

    hidden = jax.random.normal(k1, (N, L, D), dtype=jnp.float32)
    attn = jax.nn.softmax(
        jax.random.normal(k2, (N, L, S), dtype=jnp.float32), axis=-1)
    src_idx = jax.random.randint(k3, (N, S), 0, C)
    src_map = jax.nn.one_hot(src_idx, C, dtype=jnp.float32)      # (N, S, C)

    w_gen = jax.random.normal(k4, (V, D), dtype=jnp.float32) / jnp.sqrt(D)
    b_gen = jax.random.normal(k5, (V,), dtype=jnp.float32) * 0.01
    w_copy = jax.random.normal(k6, (1, D), dtype=jnp.float32) / jnp.sqrt(D)
    b_copy = jax.random.normal(k7, (1,), dtype=jnp.float32) * 0.01

    out = copy_generator(hidden, attn, src_map, w_gen, b_gen, w_copy, b_copy,
                         pad_index=PAD, row_tile=16, v_tile=128)
    out = jax.block_until_ready(out)
    assert out.shape == (N, L, V + C), out.shape

    ref_bf16 = copy_generator_ref(hidden, attn, src_map, w_gen, b_gen,
                                  w_copy, b_copy, pad_index=PAD,
                                  match_kernel_precision=True)
    ref_f32 = copy_generator_ref(hidden, attn, src_map, w_gen, b_gen,
                                 w_copy, b_copy, pad_index=PAD,
                                 match_kernel_precision=False)

    assert jnp.allclose(out, ref_bf16, atol=5e-4, rtol=1e-3), \
        float(jnp.max(jnp.abs(out - ref_bf16)))
    assert jnp.allclose(out, ref_f32, atol=1e-2, rtol=1e-2), \
        float(jnp.max(jnp.abs(out - ref_f32)))
    # the extended distribution should sum to ~1 per (n, l)
    assert jnp.allclose(out.sum(-1), 1.0, atol=2e-2)

    print("KERNEL_OK")
</pallas_src>

<mosaic_0001>
module attributes {stable_mosaic.version = 11 : i64} {
  func.func @gen_kernel(%arg0: i32, %arg1: i32, %arg2: i32, %arg3: memref<16x32xbf16, #tpu.memory_space<vmem>>, %arg4: memref<32x128xbf16, #tpu.memory_space<vmem>>, %arg5: memref<1x128xf32, #tpu.memory_space<vmem>>, %arg6: memref<32x128xbf16, #tpu.memory_space<vmem>>, %arg7: memref<1x1xf32, #tpu.memory_space<smem>>, %arg8: memref<16x128xf32, #tpu.memory_space<vmem>>, %arg9: memref<16x1xf32, #tpu.memory_space<vmem>>, %arg10: memref<16x1xf32, #tpu.memory_space<vmem>>, %arg11: memref<16x1xf32, #tpu.memory_space<vmem>>) attributes {dimension_semantics = [#tpu.dimension_semantics<parallel>, #tpu.dimension_semantics<arbitrary>, #tpu.dimension_semantics<arbitrary>], iteration_bounds = array<i64: 2, 2, 2>, scalar_prefetch = 0 : i64, scratch_operands = 3 : i64, tpu.core_type = #tpu.core_type<tc>, window_params = [{transform_indices = @transform_0, window_bounds = array<i64: 16, 32>}, {transform_indices = @transform_1, window_bounds = array<i64: 32, 128>}, {transform_indices = @transform_2, window_bounds = array<i64: 1, 128>}, {pipeline_mode = #tpu.pipeline_mode<synchronous>, transform_indices = @transform_3, window_bounds = array<i64: 32, 128>}, {transform_indices = @transform_4, window_bounds = array<i64: 1, 1>}, {transform_indices = @transform_5, window_bounds = array<i64: 16, 128>}]} {
    %c0 = arith.constant 0 : index
    %c0_0 = arith.constant 0 : index
    %0 = vector.load %arg3[%c0, %c0_0] : memref<16x32xbf16, #tpu.memory_space<vmem>>, vector<16x32xbf16>
    %1 = tpu.iota {dimensions = array<i32: 1>} : vector<1x128xi32>
    %c128_i32 = arith.constant 128 : i32
    %2 = arith.muli %arg2, %c128_i32 : i32
    %3 = vector.broadcast %2 : i32 to vector<1x128xi32>
    %4 = arith.addi %1, %3 : vector<1x128xi32>
    %c0_1 = arith.constant 0 : index
    %c0_2 = arith.constant 0 : index
    %5 = vector.load %arg4[%c0_1, %c0_2] : memref<32x128xbf16, #tpu.memory_space<vmem>>, vector<32x128xbf16>
    %cst = arith.constant dense<0.000000e+00> : vector<16x128xf32>
    %6 = tpu.matmul %0, %5, %cst {dimension_numbers = #tpu.dot_dimension_numbers<[1], [0], [0], [1], [0, 0, 1, 1], [], []>} : vector<16x32xbf16>, vector<32x128xbf16>, vector<16x128xf32> -> vector<16x128xf32>
    %c0_3 = arith.constant 0 : index
    %c0_4 = arith.constant 0 : index
    %7 = vector.load %arg5[%c0_3, %c0_4] : memref<1x128xf32, #tpu.memory_space<vmem>>, vector<1x128xf32>
    %8 = vector.broadcast %7 : vector<1x128xf32> to vector<16x128xf32>
    %9 = arith.addf %6, %8 : vector<16x128xf32>
    %c1_i32 = arith.constant 1 : i32
    %10 = vector.broadcast %c1_i32 : i32 to vector<1x128xi32>
    %11 = arith.cmpi eq, %4, %10 : vector<1x128xi32>
    %cst_5 = arith.constant -9.99999968E-21 : f32
    %12 = vector.shape_cast %11 : vector<1x128xi1> to vector<1x128xi1>
    %13 = vector.broadcast %12 : vector<1x128xi1> to vector<16x128xi1>
    %14 = vector.broadcast %cst_5 : f32 to vector<16x128xf32>
    %15 = arith.select %13, %14, %9 : vector<16x128xi1>, vector<16x128xf32>
    %c200_i32 = arith.constant 200 : i32
    %16 = vector.broadcast %c200_i32 : i32 to vector<1x128xi32>
    %17 = arith.cmpi slt, %4, %16 : vector<1x128xi32>
    %cst_6 = arith.constant -1.000000e+30 : f32
    %18 = vector.shape_cast %17 : vector<1x128xi1> to vector<1x128xi1>
    %19 = vector.broadcast %18 : vector<1x128xi1> to vector<16x128xi1>
    %20 = vector.broadcast %cst_6 : f32 to vector<16x128xf32>
    %21 = arith.select %19, %15, %20 : vector<16x128xi1>, vector<16x128xf32>
    %c0_i32 = arith.constant 0 : i32
    %22 = arith.cmpi eq, %arg1, %c0_i32 : i32
    %c0_i32_7 = arith.constant 0 : i32
    %23 = arith.cmpi eq, %arg2, %c0_i32_7 : i32
    %24 = arith.andi %22, %23 : i1
    %25 = arith.extui %24 : i1 to i32
    %c0_i32_8 = arith.constant 0 : i32
    %26 = arith.cmpi ne, %25, %c0_i32_8 : i32
    scf.if %26 {
      %cst_13 = arith.constant -1.000000e+30 : f32
      %33 = vector.broadcast %cst_13 : f32 to vector<16x1xf32>
      %c0_14 = arith.constant 0 : index
      %c0_15 = arith.constant 0 : index
      %34 = vector.load %arg9[%c0_14, %c0_15] : memref<16x1xf32, #tpu.memory_space<vmem>>, vector<16x1xf32>
      tpu.vector_store %arg9[%c0_14, %c0_15], %33 {strides = array<i32>} : memref<16x1xf32, #tpu.memory_space<vmem>>, vector<16x1xf32>,
      %cst_16 = arith.constant 0.000000e+00 : f32
      %35 = vector.broadcast %cst_16 : f32 to vector<16x1xf32>
      %c0_17 = arith.constant 0 : index
      %c0_18 = arith.constant 0 : index
      %36 = vector.load %arg10[%c0_17, %c0_18] : memref<16x1xf32, #tpu.memory_space<vmem>>, vector<16x1xf32>
      tpu.vector_store %arg10[%c0_17, %c0_18], %35 {strides = array<i32>} : memref<16x1xf32, #tpu.memory_space<vmem>>, vector<16x1xf32>,
      %c0_19 = arith.constant 0 : index
      %c0_20 = arith.constant 0 : index
      %37 = vector.load %arg6[%c0_19, %c0_20] : memref<32x128xbf16, #tpu.memory_space<vmem>>, vector<32x128xbf16>
      %cst_21 = arith.constant dense<0.000000e+00> : vector<16x128xf32>
      %38 = tpu.matmul %0, %37, %cst_21 {dimension_numbers = #tpu.dot_dimension_numbers<[1], [0], [0], [1], [0, 0, 1, 1], [], []>} : vector<16x32xbf16>, vector<32x128xbf16>, vector<16x128xf32> -> vector<16x128xf32>
      %39 = vector.extract_strided_slice %38 {offsets = [0, 0], sizes = [16, 1], strides = [1, 1]} : vector<16x128xf32> to vector<16x1xf32>
      %c0_22 = arith.constant 0 : index
      %c0_23 = arith.constant 0 : index
      %40 = memref.load %arg7[%c0_22, %c0_23] : memref<1x1xf32, #tpu.memory_space<smem>>
      %41 = vector.broadcast %40 : f32 to vector<16x1xf32>
      %42 = arith.addf %39, %41 : vector<16x1xf32>
      %43 = arith.negf %42 : vector<16x1xf32>
      %44 = math.exp %43 : vector<16x1xf32>
      %cst_24 = arith.constant 1.000000e+00 : f32
      %45 = vector.broadcast %cst_24 : f32 to vector<16x1xf32>
      %46 = arith.addf %45, %44 : vector<16x1xf32>
      %47 = arith.divf %45, %46 : vector<16x1xf32>
      %c0_25 = arith.constant 0 : index
      %c0_26 = arith.constant 0 : index
      %48 = vector.load %arg11[%c0_25, %c0_26] : memref<16x1xf32, #tpu.memory_space<vmem>>, vector<16x1xf32>
      tpu.vector_store %arg11[%c0_25, %c0_26], %47 {strides = array<i32>} : memref<16x1xf32, #tpu.memory_space<vmem>>, vector<16x1xf32>,
    } else {
    }
    %c0_i32_9 = arith.constant 0 : i32
    %27 = arith.cmpi eq, %arg1, %c0_i32_9 : i32
    %28 = arith.extui %27 : i1 to i32
    %c0_i32_10 = arith.constant 0 : i32
    %29 = arith.cmpi ne, %28, %c0_i32_10 : i32
    scf.if %29 {
      %c0_13 = arith.constant 0 : index
      %c0_14 = arith.constant 0 : index
      %33 = vector.load %arg9[%c0_13, %c0_14] : memref<16x1xf32, #tpu.memory_space<vmem>>, vector<16x1xf32>
      %cst_15 = arith.constant dense<0xFF800000> : vector<16xf32>
      %34 = vector.multi_reduction <maximumf>, %21, %cst_15 [1] : vector<16x128xf32> to vector<16xf32>
      %35 = vector.shape_cast %34 : vector<16xf32> to vector<16x1xf32>
      %36 = arith.maximumf %33, %35 : vector<16x1xf32>
      %c0_16 = arith.constant 0 : index
      %c0_17 = arith.constant 0 : index
      %37 = vector.load %arg10[%c0_16, %c0_17] : memref<16x1xf32, #tpu.memory_space<vmem>>, vector<16x1xf32>
      %38 = arith.subf %33, %36 : vector<16x1xf32>
      %39 = math.exp %38 : vector<16x1xf32>
      %40 = arith.mulf %37, %39 : vector<16x1xf32>
      %41 = vector.broadcast %36 : vector<16x1xf32> to vector<16x128xf32>
      %42 = arith.subf %21, %41 : vector<16x128xf32>
      %43 = math.exp %42 : vector<16x128xf32>
      %cst_18 = arith.constant dense<0.000000e+00> : vector<16xf32>
      %44 = vector.multi_reduction <add>, %43, %cst_18 [1] : vector<16x128xf32> to vector<16xf32>
      %45 = vector.shape_cast %44 : vector<16xf32> to vector<16x1xf32>
      %46 = arith.addf %40, %45 : vector<16x1xf32>
      %c0_19 = arith.constant 0 : index
      %c0_20 = arith.constant 0 : index
      %47 = vector.load %arg10[%c0_19, %c0_20] : memref<16x1xf32, #tpu.memory_space<vmem>>, vector<16x1xf32>
      tpu.vector_store %arg10[%c0_19, %c0_20], %46 {strides = array<i32>} : memref<16x1xf32, #tpu.memory_space<vmem>>, vector<16x1xf32>,
      %c0_21 = arith.constant 0 : index
      %c0_22 = arith.constant 0 : index
      %48 = vector.load %arg9[%c0_21, %c0_22] : memref<16x1xf32, #tpu.memory_space<vmem>>, vector<16x1xf32>
      tpu.vector_store %arg9[%c0_21, %c0_22], %36 {strides = array<i32>} : memref<16x1xf32, #tpu.memory_space<vmem>>, vector<16x1xf32>,
    } else {
    }
    %c1_i32_11 = arith.constant 1 : i32
    %30 = arith.cmpi eq, %arg1, %c1_i32_11 : i32
    %31 = arith.extui %30 : i1 to i32
    %c0_i32_12 = arith.constant 0 : i32
    %32 = arith.cmpi ne, %31, %c0_i32_12 : i32
    scf.if %32 {
      %c0_13 = arith.constant 0 : index
      %c0_14 = arith.constant 0 : index
      %33 = vector.load %arg11[%c0_13, %c0_14] : memref<16x1xf32, #tpu.memory_space<vmem>>, vector<16x1xf32>
      %cst_15 = arith.constant 1.000000e+00 : f32
      %34 = vector.broadcast %cst_15 : f32 to vector<16x1xf32>
      %35 = arith.subf %34, %33 : vector<16x1xf32>
      %c0_16 = arith.constant 0 : index
      %c0_17 = arith.constant 0 : index
      %36 = vector.load %arg10[%c0_16, %c0_17] : memref<16x1xf32, #tpu.memory_space<vmem>>, vector<16x1xf32>
      %37 = arith.divf %35, %36 : vector<16x1xf32>
      %c0_18 = arith.constant 0 : index
      %c0_19 = arith.constant 0 : index
      %38 = vector.load %arg9[%c0_18, %c0_19] : memref<16x1xf32, #tpu.memory_space<vmem>>, vector<16x1xf32>
      %39 = vector.broadcast %38 : vector<16x1xf32> to vector<16x128xf32>
      %40 = arith.subf %21, %39 : vector<16x128xf32>
      %41 = math.exp %40 : vector<16x128xf32>
      %42 = vector.broadcast %37 : vector<16x1xf32> to vector<16x128xf32>
      %43 = arith.mulf %41, %42 : vector<16x128xf32>
      %c0_20 = arith.constant 0 : index
      %c0_21 = arith.constant 0 : index
      %44 = vector.load %arg8[%c0_20, %c0_21] : memref<16x128xf32, #tpu.memory_space<vmem>>, vector<16x128xf32>
      tpu.vector_store %arg8[%c0_20, %c0_21], %43 {strides = array<i32>} : memref<16x128xf32, #tpu.memory_space<vmem>>, vector<16x128xf32>,
    } else {
    }
    return
  }
  func.func @transform_0(%arg0: i32, %arg1: i32, %arg2: i32) -> (i32, i32) {
    %c0_i32 = arith.constant 0 : i32
    %c0_i32_0 = arith.constant 0 : i32
    return %arg0, %c0_i32 : i32, i32
  }
  func.func @transform_1(%arg0: i32, %arg1: i32, %arg2: i32) -> (i32, i32) {
    %c0_i32 = arith.constant 0 : i32
    %c0_i32_0 = arith.constant 0 : i32
    return %c0_i32, %arg2 : i32, i32
  }
  func.func @transform_2(%arg0: i32, %arg1: i32, %arg2: i32) -> (i32, i32) {
    %c0_i32 = arith.constant 0 : i32
    %c0_i32_0 = arith.constant 0 : i32
    return %c0_i32, %arg2 : i32, i32
  }
  func.func @transform_3(%arg0: i32, %arg1: i32, %arg2: i32) -> (i32, i32) {
    %c0_i32 = arith.constant 0 : i32
    %c0_i32_0 = arith.constant 0 : i32
    %c0_i32_1 = arith.constant 0 : i32
    return %c0_i32, %c0_i32_0 : i32, i32
  }
  func.func @transform_4(%arg0: i32, %arg1: i32, %arg2: i32) -> (i32, i32) {
    %c0_i32 = arith.constant 0 : i32
    %c0_i32_0 = arith.constant 0 : i32
    %c0_i32_1 = arith.constant 0 : i32
    return %c0_i32, %c0_i32_0 : i32, i32
  }
  func.func @transform_5(%arg0: i32, %arg1: i32, %arg2: i32) -> (i32, i32) {
    %0 = arith.muli %arg2, %arg1 : i32
    %c0_i32 = arith.constant 0 : i32
    return %arg0, %0 : i32, i32
  }
}

</mosaic_0001>

<llo_original>
// kernel: tpu_custom_call.1
$region0: #{tpu_custom_call.1}
  #allocation0 [shape = 'u32[]', space=smem, size = 0x4, offset = 0x4, fixed_abs, tag = 'smem constant byte address 0x4 - core index']
  #allocation1 [shape = 'u32[72,128]{1,0:T(1,128)}', space=vmem, size = 0x9000, scoped, tag = 'internal scratch']
  #allocation2 [shape = 'f32[16,1]{1,0:T(8,128)}', space=vmem, size = 0x2000, scoped, tag = 'scratch operand']
  #allocation3 [shape = 'f32[16,1]{1,0:T(8,128)}', space=vmem, size = 0x2000, scoped, tag = 'scratch operand']
  #allocation4 [shape = 'f32[16,1]{1,0:T(8,128)}', space=vmem, size = 0x2000, scoped, tag = 'scratch operand']
  #allocation5 [shape = 'f32[1,1]{1,0:T(1,128)S(6)}', space=smem, size = 0x200, scoped, tag = 'scoped memory for tpu_custom_call.1']
  %s0 = inlined_call_operand.hbm [shape: bf16[32,32], index: 0, kind: input, shape index: {}]
  %s1 = inlined_call_operand.hbm [shape: bf16[32,256], index: 1, kind: input, shape index: {}]
  %s2 = inlined_call_operand.vmem [shape: f32[1,256], index: 2, kind: input, shape index: {}]
  %s3 = inlined_call_operand.hbm [shape: bf16[32,128], index: 3, kind: input, shape index: {}]
  %s4 = inlined_call_operand.<no memory space> [shape: f32[1,1], index: 4, kind: input, shape index: {}]
  %s5 = inlined_call_operand.hbm [shape: f32[32,256], index: 5, kind: output, shape index: {}]
  %s6 = sld [smem:[#allocation0]]
  $region77: #{tpu_custom_call.1} parent=0
    _
  %s8 = ssub.s32 1, %s6
  %s9 = scalar_select 0, %s8, %s6
  %10 = sst [smem:[#allocation5]] %s4
  $region1: #{tpu_custom_call.1} parent=0
    #allocation6 [shape = 'u8[8192]{0}', space=vmem, size = 0x2000, scoped, tag = 'input window, operand 0']
    #allocation7 [shape = 's32[2]{0}', space=sflag, size = 0x8, scoped, tag = 'scoped memory for tpu_custom_call.1']
    #allocation8 [shape = 's32[2]{0}', space=sflag, size = 0x8, scoped, tag = 'scoped memory for tpu_custom_call.1']
    #allocation9 [shape = 'u8[16384]{0}', space=vmem, size = 0x4000, scoped, tag = 'input window, operand 1']
    #allocation10 [shape = 's32[2]{0}', space=sflag, size = 0x8, scoped, tag = 'scoped memory for tpu_custom_call.1']
    #allocation11 [shape = 'u8[8192]{0}', space=vmem, size = 0x2000, scoped, tag = 'input window, operand 3, single buffered']
    #allocation12 [shape = 'u8[16384]{0}', space=vmem, size = 0x4000, scoped, tag = 'output window, operand 0']
    %11 = vsyncpa [#allocation7], 0
    %s12 = scalar_lea.sflag [#allocation7], 1
    %13 = vsyncpa %s12, 0
    %14 = vsyncpa [#allocation10], 0
    %s15 = scalar_lea.sflag [#allocation10], 1
    %16 = vsyncpa %s15, 0
    %17 = vsyncpa [#allocation8], 0
    %s18 = scalar_lea.sflag [#allocation8], 1
    %19 = vsyncpa %s18, 0
    loop: start=0, step=1, limit=10
    $region2: #{tpu_custom_call.1} parent=1 // loop_pre_header
      _
    $region3: #{tpu_custom_call.1} parent=1 // loop_header
      %s21 = sphi 0, %s25
      %p22 = scmp.ge.s32.totalorder %s21, 10
      %s28 = sphi 0, %s47
      %s29 = sphi 0, %s43
      %s30 = sphi 0, %s39
      %s31 = sphi 0, %s28
      %s32 = sphi 0, %s29
      %s33 = sphi 0, %s30
      %s34 = sphi 0, %s31
      %s35 = sphi 0, %s32
      %s36 = sphi 0, %s33
      %s50 = sphi 0, %s52
      %s53 = sphi 0, %s50
      %s54 = sphi 0, %s53
      %s70 = sphi 0, %s54
      %s76 = sphi 0, %s78
      %s79 = sphi 0, %s76
      %s80 = sphi 0, %s79
      %s96 = sphi 0, %s80
      %s102 = sphi 0, %s104
      %s105 = sphi 0, %s102
      %s106 = sphi 0, %s105
      %s122 = sphi 0, %s106
      %s126 = sphi 0, %s126
      %s128 = sphi 0, %s126
      %s129 = sphi 0, %s128
      %s143 = sphi 0, %s129
      %s147 = sphi 0, %s147
      %s149 = sphi 0, %s147
      %s150 = sphi 0, %s149
      %s164 = sphi 0, %s150
      %s174 = sphi 0, %s176
      %s177 = sphi 0, %s174
      %s178 = sphi 0, %s177
      %s194 = sphi 0, %s178
    $region4: #{tpu_custom_call.1} parent=1 // loop_header_branch
      %24 = sbr.rel (%p22) target = $region8
    $region5: #{tpu_custom_call.1} parent=1 // loop_body
      %s26 = ssub.s32 %s21, 1
      %s27 = ssub.s32 %s21, 2
      %s37 = sadd.s32 1, %s30
      %p38 = scmp.ge.s32.totalorder %s37, 2
      %s39 = scalar_select %p38, 0, %s37
      %s40 = sadd.s32 1, %s29
      %s41 = scalar_select %p38, %s40, %s29
      %p42 = scmp.ge.s32.totalorder %s41, 2
      %s43 = scalar_select %p42, 0, %s41
      %s44 = sadd.s32 1, %s28
      %s45 = scalar_select %p42, %s44, %s28
      %p46 = scmp.ge.s32.totalorder %s45, 2
      %s47 = scalar_select %p46, 0, %s45
      %s48 = ssub.s32 %s28, %s47
      %p49 = scmp.eq.s32.totalorder %s48, 0
      %s51 = sadd.s32 %s50, 1
      %s52 = scalar_select %p49, %s50, %s51
      %p55 = pneg %p49
      %p56 = scmp.eq.s32.totalorder %s21, 7
      %p57 = por %p55, %p56
      %p58 = scmp.ne.s32.totalorder %s50, %s53
      %p59 = scmp.eq.s32.totalorder %s21, 0
      %p60 = por %p58, %p59
      %p61 = scmp.ne.s32.totalorder %s50, %s53
      %p62 = scmp.eq.s32.totalorder %s26, 7
      %p63 = por %p61, %p62
      %p64 = scmp.ne.s32.totalorder %s53, %s54
      %p65 = scmp.eq.s32.totalorder %s26, 0
      %p66 = por %p64, %p65
      %p67 = scmp.ne.s32.totalorder %s53, %s54
      %p68 = scmp.eq.s32.totalorder %s27, 7
      %p69 = por %p67, %p68
      %p71 = scmp.ne.s32.totalorder %s54, %s70
      %p72 = scmp.eq.s32.totalorder %s27, 0
      %p73 = por %p71, %p72
      %s74 = ssub.s32 %s30, %s39
      %p75 = scmp.eq.s32.totalorder %s74, 0
      %s77 = sadd.s32 %s76, 1
      %s78 = scalar_select %p75, %s76, %s77
      %p81 = pneg %p75
      %p82 = scmp.eq.s32.totalorder %s21, 7
      %p83 = por %p81, %p82
      %p84 = scmp.ne.s32.totalorder %s76, %s79
      %p85 = scmp.eq.s32.totalorder %s21, 0
      %p86 = por %p84, %p85
      %p87 = scmp.ne.s32.totalorder %s76, %s79
      %p88 = scmp.eq.s32.totalorder %s26, 7
      %p89 = por %p87, %p88
      %p90 = scmp.ne.s32.totalorder %s79, %s80
      %p91 = scmp.eq.s32.totalorder %s26, 0
      %p92 = por %p90, %p91
      %p93 = scmp.ne.s32.totalorder %s79, %s80
      %p94 = scmp.eq.s32.totalorder %s27, 7
      %p95 = por %p93, %p94
      %p97 = scmp.ne.s32.totalorder %s80, %s96
      %p98 = scmp.eq.s32.totalorder %s27, 0
      %p99 = por %p97, %p98
      %s100 = ssub.s32 %s30, %s39
      %p101 = scmp.eq.s32.totalorder %s100, 0
      %s103 = sadd.s32 %s102, 1
      %s104 = scalar_select %p101, %s102, %s103
      %p107 = pneg %p101
      %p108 = scmp.eq.s32.totalorder %s21, 7
      %p109 = por %p107, %p108
      %p110 = scmp.ne.s32.totalorder %s102, %s105
      %p111 = scmp.eq.s32.totalorder %s21, 0
      %p112 = por %p110, %p111
      %p113 = scmp.ne.s32.totalorder %s102, %s105
      %p114 = scmp.eq.s32.totalorder %s26, 7
      %p115 = por %p113, %p114
      %p116 = scmp.ne.s32.totalorder %s105, %s106
      %p117 = scmp.eq.s32.totalorder %s26, 0
      %p118 = por %p116, %p117
      %p119 = scmp.ne.s32.totalorder %s105, %s106
      %p120 = scmp.eq.s32.totalorder %s27, 7
      %p121 = por %p119, %p120
      %p123 = scmp.ne.s32.totalorder %s106, %s122
      %p124 = scmp.eq.s32.totalorder %s27, 0
      %p125 = por %p123, %p124
      %s127 = sadd.s32 %s126, 1
      %p130 = scmp.eq.s32.totalorder %s21, 7
      %p131 = scmp.ne.s32.totalorder %s126, %s128
      %p132 = scmp.eq.s32.totalorder %s21, 0
      %p133 = por %p131, %p132
      %p134 = scmp.ne.s32.totalorder %s126, %s128
      %p135 = scmp.eq.s32.totalorder %s26, 7
      %p136 = por %p134, %p135
      %p137 = scmp.ne.s32.totalorder %s128, %s129
      %p138 = scmp.eq.s32.totalorder %s26, 0
      %p139 = por %p137, %p138
      %p140 = scmp.ne.s32.totalorder %s128, %s129
      %p141 = scmp.eq.s32.totalorder %s27, 7
      %p142 = por %p140, %p141
      %p144 = scmp.ne.s32.totalorder %s129, %s143
      %p145 = scmp.eq.s32.totalorder %s27, 0
      %p146 = por %p144, %p145
      %s148 = sadd.s32 %s147, 1
      %p151 = scmp.eq.s32.totalorder %s21, 7
      %p152 = scmp.ne.s32.totalorder %s147, %s149
      %p153 = scmp.eq.s32.totalorder %s21, 0
      %p154 = por %p152, %p153
      %p155 = scmp.ne.s32.totalorder %s147, %s149
      %p156 = scmp.eq.s32.totalorder %s26, 7
      %p157 = por %p155, %p156
      %p158 = scmp.ne.s32.totalorder %s149, %s150
      %p159 = scmp.eq.s32.totalorder %s26, 0
      %p160 = por %p158, %p159
      %p161 = scmp.ne.s32.totalorder %s149, %s150
      %p162 = scmp.eq.s32.totalorder %s27, 7
      %p163 = por %p161, %p162
      %p165 = scmp.ne.s32.totalorder %s150, %s164
      %p166 = scmp.eq.s32.totalorder %s27, 0
      %p167 = por %p165, %p166
      %s168 = smul.u32 %s30, %s29
      %s169 = smul.u32 %s39, %s43
      %s170 = ssub.s32 %s28, %s47
      %s171 = ssub.s32 %s168, %s169
      %s172 = sor.u32 %s170, %s171
      %p173 = scmp.eq.s32.totalorder %s172, 0
      %s175 = sadd.s32 %s174, 1
      %s176 = scalar_select %p173, %s174, %s175
      %p179 = pneg %p173
      %p180 = scmp.eq.s32.totalorder %s21, 7
      %p181 = por %p179, %p180
      %p182 = scmp.ne.s32.totalorder %s174, %s177
      %p183 = scmp.eq.s32.totalorder %s21, 0
      %p184 = por %p182, %p183
      %p185 = scmp.ne.s32.totalorder %s174, %s177
      %p186 = scmp.eq.s32.totalorder %s26, 7
      %p187 = por %p185, %p186
      %p188 = scmp.ne.s32.totalorder %s177, %s178
      %p189 = scmp.eq.s32.totalorder %s26, 0
      %p190 = por %p188, %p189
      %p191 = scmp.ne.s32.totalorder %s177, %s178
      %p192 = scmp.eq.s32.totalorder %s27, 7
      %p193 = por %p191, %p192
      %p195 = scmp.ne.s32.totalorder %s178, %s194
      %p196 = scmp.eq.s32.totalorder %s27, 0
      %p197 = por %p195, %p196
      %p198 = scmp.le.s32.totalorder 1, %s21
      %p199 = scmp.lt.s32.totalorder %s21, 9
      %p200 = pnand %p198, %p199
      %p201 = pneg %p200
      // Predicated region
      $region9: #{tpu_custom_call.1} parent=5 // pred_check
        _
      $region10: #{tpu_custom_call.1} parent=5 // pred_check_branch
        %203 = sbr.rel (%p200) target = $region12
      $region11: #{tpu_custom_call.1} parent=5 // pred_region
        %s204 = ssub.s32 %s21, 1
        // Predicated region
        $region13: #{tpu_custom_call.1} parent=11 // pred_check
          %p205 = pneg %p139
        $region14: #{tpu_custom_call.1} parent=11 // pred_check_branch
          %207 = sbr.rel (%p205) target = $region16
        $region15: #{tpu_custom_call.1} parent=11 // pred_region
          %209 = vsyncadd [#allocation10], 0
          %s210 = sshll.u32 %s3, 4
          %s211 = int_to_ptr.hbm [resolvable:$true] %s210
          %s212 = sshll.u32 [#allocation11], 4
          %s213 = int_to_ptr.vmem [resolvable:$true] %s212
          %218 = dma.hbm_to_vmem [thread:$0]  %s211, 256, %s213, [#allocation10], 64, 64, 4
        $region16: #{tpu_custom_call.1} parent=11 // pred_fallthru
          _
        // Predicated region
        $region17: #{tpu_custom_call.1} parent=11 // pred_check
          %p219 = pneg %p160
        $region18: #{tpu_custom_call.1} parent=11 // pred_check_branch
          %221 = sbr.rel (%p219) target = $region20
        $region19: #{tpu_custom_call.1} parent=11 // pred_region
          _
        $region20: #{tpu_custom_call.1} parent=11 // pred_fallthru
          _
      $region12: #{tpu_custom_call.1} parent=5 // pred_fallthru
        _
      %p222 = scmp.lt.s32.totalorder %s21, 8
      // Predicated region
      $region21: #{tpu_custom_call.1} parent=5 // pred_check
        %p223 = pneg %p222
      $region22: #{tpu_custom_call.1} parent=5 // pred_check_branch
        %225 = sbr.rel (%p223) target = $region24
      $region23: #{tpu_custom_call.1} parent=5 // pred_region
        // Predicated region
        $region25: #{tpu_custom_call.1} parent=23 // pred_check
          %p226 = pneg %p60
        $region26: #{tpu_custom_call.1} parent=23 // pred_check_branch
          %228 = sbr.rel (%p226) target = $region28
        $region27: #{tpu_custom_call.1} parent=23 // pred_region
          %s229 = sand.u32 %s50, 1
          %s230 = scalar_lea.sflag [#allocation7], %s229
          %s231 = sand.u32 %s50, 1
          %s232 = smul.addr %s231, 8
          %s233 = scalar_lea.vmem [#allocation6], %s232
          %s234 = smul.u32 2, %s28
          %236 = vsyncadd %s230, 0
          %s237 = smul.addr %s234, 4
          %s238 = scalar_lea.hbm %s0, %s237
          %s239 = sshll.u32 %s238, 4
          %s240 = int_to_ptr.hbm [resolvable:$true] %s239
          %s241 = sshll.u32 %s233, 4
          %s242 = int_to_ptr.vmem [resolvable:$true] %s241
          %247 = dma.hbm_to_vmem [thread:$0]  %s240, 128, %s242, %s230, 64, 64, 4
        $region28: #{tpu_custom_call.1} parent=23 // pred_fallthru
          _
        // Predicated region
        $region29: #{tpu_custom_call.1} parent=23 // pred_check
          %p248 = pneg %p86
        $region30: #{tpu_custom_call.1} parent=23 // pred_check_branch
          %250 = sbr.rel (%p248) target = $region32
        $region31: #{tpu_custom_call.1} parent=23 // pred_region
          %s251 = sand.u32 %s21, 1
          %s252 = scalar_lea.sflag [#allocation10], %s251
          %s253 = sand.u32 %s76, 1
          %s254 = smul.addr %s253, 16
          %s255 = scalar_lea.vmem [#allocation9], %s254
          %257 = vsyncadd %s252, 0
          %s258 = smul.addr %s30, 4
          %s259 = scalar_lea.hbm %s1, %s258
          %s260 = sshll.u32 %s259, 4
          %s261 = int_to_ptr.hbm [resolvable:$true] %s260
          %s262 = sshll.u32 %s255, 4
          %s263 = int_to_ptr.vmem [resolvable:$true] %s262
          %268 = dma.hbm_to_vmem [thread:$0]  %s261, 256, %s263, %s252, 128, 64, 4
        $region32: #{tpu_custom_call.1} parent=23 // pred_fallthru
          _
        // Predicated region
        $region33: #{tpu_custom_call.1} parent=23 // pred_check
          %p269 = pneg %p112
        $region34: #{tpu_custom_call.1} parent=23 // pred_check_branch
          %271 = sbr.rel (%p269) target = $region36
        $region35: #{tpu_custom_call.1} parent=23 // pred_region
          %p272 = scmp.lt.s32.totalorder %s30, 1
          %s273 = scalar_select %p272, %s30, 1
          %s274 = scalar_lea.vmem %s2, %s273
        $region36: #{tpu_custom_call.1} parent=23 // pred_fallthru
          _
      $region24: #{tpu_custom_call.1} parent=5 // pred_fallthru
        _
      %p275 = scmp.le.s32.totalorder 1, %s21
      %p276 = scmp.lt.s32.totalorder %s21, 9
      %p277 = pnand %p275, %p276
      %p278 = pneg %p277
      // Predicated region
      $region37: #{tpu_custom_call.1} parent=5 // pred_check
        _
      $region38: #{tpu_custom_call.1} parent=5 // pred_check_branch
        %280 = sbr.rel (%p277) target = $region40
      $region39: #{tpu_custom_call.1} parent=5 // pred_region
        %s281 = ssub.s32 %s21, 1
        %s282 = sand.u32 %s53, 1
        %s283 = scalar_lea.sflag [#allocation7], %s282
        %s284 = sand.u32 %s53, 1
        %s285 = smul.addr %s284, 8
        %s286 = scalar_lea.vmem [#allocation6], %s285
        // Predicated region
        $region41: #{tpu_custom_call.1} parent=39 // pred_check
          %p287 = pneg %p66
        $region42: #{tpu_custom_call.1} parent=39 // pred_check_branch
          %289 = sbr.rel (%p287) target = $region44
        $region43: #{tpu_custom_call.1} parent=39 // pred_region
          %291 = dma.done %s283, 128
        $region44: #{tpu_custom_call.1} parent=39 // pred_fallthru
          _
        %s292 = sand.u32 %s26, 1
        %s293 = scalar_lea.sflag [#allocation10], %s292
        %s294 = sand.u32 %s79, 1
        %s295 = smul.addr %s294, 16
        %s296 = scalar_lea.vmem [#allocation9], %s295
        // Predicated region
        $region45: #{tpu_custom_call.1} parent=39 // pred_check
          %p297 = pneg %p92
        $region46: #{tpu_custom_call.1} parent=39 // pred_check_branch
          %299 = sbr.rel (%p297) target = $region48
        $region47: #{tpu_custom_call.1} parent=39 // pred_region
          %301 = dma.done %s293, 256
        $region48: #{tpu_custom_call.1} parent=39 // pred_fallthru
          _
        // Predicated region
        $region49: #{tpu_custom_call.1} parent=39 // pred_check
          %p302 = pneg %p139
        $region50: #{tpu_custom_call.1} parent=39 // pred_check_branch
          %304 = sbr.rel (%p302) target = $region52
        $region51: #{tpu_custom_call.1} parent=39 // pred_region
          %306 = dma.done [#allocation10], 256
        $region52: #{tpu_custom_call.1} parent=39 // pred_fallthru
          _
        %s307 = sand.u32 %s53, 1
        %s308 = scalar_lea.sflag [#allocation7], %s307
        %s309 = sand.u32 %s53, 1
        %s310 = smul.addr %s309, 8
        %s311 = scalar_lea.vmem [#allocation6], %s310
        %p312 = pneg %p66
        %p313 = pneg %p63
        %s314 = sand.u32 %s26, 1
        %s315 = scalar_lea.sflag [#allocation10], %s314
        %s316 = sand.u32 %s79, 1
        %s317 = smul.addr %s316, 16
        %s318 = scalar_lea.vmem [#allocation9], %s317
        %p319 = pneg %p92
        %p320 = pneg %p89
        %p321 = scmp.lt.s32.totalorder %s33, 1
        %s322 = scalar_select %p321, %s33, 1
        %s323 = scalar_lea.vmem %s2, %s322
        %p324 = pneg %p118
        %p325 = pneg %p115
        %p326 = pneg %p139
        %p327 = pneg %p136
        %p328 = pneg %p160
        %p329 = pneg %p157
        %p330 = pneg %p190
        %p331 = pneg %p187
        %s332 = sand.u32 %s177, 1
        %s333 = scalar_lea.sflag [#allocation8], %s332
        %s334 = sand.u32 %s177, 1
        %s335 = smul.addr %s334, 16
        %s336 = scalar_lea.vmem [#allocation12], %s335
        %s337 = smul.u32 2, %s31
        %p338 = scmp.lt.s32.totalorder %s33, 1
        %s339 = scalar_select %p338, %s33, 1
        %s340 = scalar_lea.vmem %s2, %s339
        %s341 = smul.u32 %s33, %s32
        %s342 = smul.u32 2, %s31
        %v344 = vld [vmem:[%s286] sm:$0xf]
        %v345 = vld [vmem:[%s286 + $0x4] sm:$0xf]
        %v346 = vlaneseq
        %v347 = vand.u32 %v346, 127
        %s348 = smul.u32 %s33, 128
        %v349 = vstv %s348
        %v350 = vadd.s32 %v347, %v349
        %v351 = vld [vmem:[%s296] sm:$0xf]
        %v352 = vld [vmem:[%s296 + $0x4] sm:$0xf]
        %v353 = vld [vmem:[%s296 + $0x8] sm:$0xf]
        %v354 = vld [vmem:[%s296 + $0xc] sm:$0xf]
        %v355 = vld [vmem:[%s340] sm:$0x1]
        %v357 = vperm.slane %v355, 0
        %v361 = vunpack.c.l.b16 %v344
        %v362 = vunpack.c.l.b16 %v345
        %v363 = vpack.c.b16 %v362, %v361
        %v368 = vunpack.c.l.b16 %v351
        %v369 = vunpack.c.l.b16 %v352
        %v370 = vunpack.c.l.b16 %v353
        %v371 = vunpack.c.l.b16 %v354
        %v372 = vpack.c.b16 %v369, %v368
        %v373 = vpack.c.b16 %v371, %v370
        %vm376 = vcmask 261120
        %v378 = vsel %vm376, %v363, 0
        %380 = vmatpush.bf16.msra.mxu0 0
        %381 = vmatpush.bf16.msra.mxu0 0
        %382 = vmatpush.bf16.msra.mxu0 0
        %383 = vmatpush.bf16.msra.mxu0 0
        %384 = vmatpush.bf16.msra.mxu0 0
        %385 = vmatpush.bf16.msra.mxu0 0
        %386 = vmatpush.bf16.msra.mxu0 %v373
        %387 = vmatpush.bf16.msra.mxu0 %v372
        %388 = vmatmul.bf16.gmra.mxu0 %v378
        %v389 = vpop.f32.mrf.mxu0
        %v390 = vadd.f32 %v357, %v389
        %v391 = vpop.f32.mrf.mxu0
        %v392 = vadd.f32 %v357, %v391
        %393 = vdwg.mxu0
        %vm394 = vcmp.eq.s32.totalorder %v350, 1
        %v395 = vsel %vm394, 1, 0
        %vm396 = vcmp.eq.s32.totalorder %v395, 1
        %v397 = vsel %vm396, -1e-20, %v390
        %v398 = vsel %vm396, -1e-20, %v392
        %vm399 = vcmp.lt.s32.totalorder %v350, 200
        %v400 = vsel %vm399, 1, 0
        %vm401 = vcmp.eq.s32.totalorder %v400, 1
        %v402 = vsel %vm401, %v397, -1e+30
        %v403 = vsel %vm401, %v398, -1e+30
        %p404 = scmp.eq.s32.totalorder %s32, 0
        %p405 = scmp.eq.s32.totalorder %s33, 0
        %p406 = pnand %p404, %p405
        %p407 = pneg %p406
        // Predicated region
        $region53: #{tpu_custom_call.1} parent=39 // pred_check
          _
        $region54: #{tpu_custom_call.1} parent=39 // pred_check_branch
          %409 = sbr.rel (%p406) target = $region56
        $region55: #{tpu_custom_call.1} parent=39 // pred_region
          %vm410 = vcmask 7168
          %411 = vst.msk [vmem:[#allocation2] sm:$0xff] %vm410, -1e+30
          %412 = vst.msk [vmem:[#allocation2 + $0x8] sm:$0xff] %vm410, -1e+30
          %413 = vst.msk [vmem:[#allocation3] sm:$0xff] %vm410, 0.0
          %414 = vst.msk [vmem:[#allocation3 + $0x8] sm:$0xff] %vm410, 0.0
          %v415 = vld [vmem:[#allocation11] sm:$0xf]
          %v416 = vld [vmem:[#allocation11 + $0x4] sm:$0xf]
          %v417 = vld [vmem:[#allocation11 + $0x8] sm:$0xf]
          %v418 = vld [vmem:[#allocation11 + $0xc] sm:$0xf]
          %v423 = vunpack.c.l.b16 %v415
          %v424 = vunpack.c.l.b16 %v416
          %v425 = vunpack.c.l.b16 %v417
          %v426 = vunpack.c.l.b16 %v418
          %v427 = vpack.c.b16 %v424, %v423
          %v428 = vpack.c.b16 %v426, %v425
          %431 = vmatpush.bf16.msra.mxu0 0
          %432 = vmatpush.bf16.msra.mxu0 0
          %433 = vmatpush.bf16.msra.mxu0 0
          %434 = vmatpush.bf16.msra.mxu0 0
          %435 = vmatpush.bf16.msra.mxu0 0
          %436 = vmatpush.bf16.msra.mxu0 0
          %437 = vmatpush.bf16.msra.mxu0 %v428
          %438 = vmatpush.bf16.msra.mxu0 %v427
          %439 = vmatmul.bf16.gmra.mxu0 %v378
          %v440 = vpop.f32.mrf.mxu0
          %v441 = vadd.f32 0.0, %v440
          %v442 = vpop.f32.mrf.mxu0
          %v443 = vadd.f32 0.0, %v442
          %444 = vdwg.mxu0
          %s445 = sld [smem:[#allocation5]]
          %v446 = vstv %s445
          %v447 = vadd.f32 %v441, %v446
          %v448 = vadd.f32 %v443, %v446
          %v449 = vxor.u32 %v447, 2147483648
          %v450 = vxor.u32 %v448, 2147483648
          %v451 = vmul.f32 %v449, 1.442695
          %v452 = vpow.pop %v451
          %v453 = vmul.f32 %v450, 1.442695
          %v454 = vpow.pop %v453
          %v455 = vadd.f32 %v452, 1.0
          %v456 = vadd.f32 %v454, 1.0
          %v457 = vrcp.pop %v455
          %v458 = vmul.f32 %v455, %v457
          %v459 = vsub.f32 1.0, %v458
          %v460 = vmul.f32 %v457, %v459
          %v461 = vadd.f32 %v457, %v460
          %vm462 = vweird.f32 %v455
          %vm463 = vweird.f32 %v457
          %vm464 = vmor %vm462, %vm463
          %v465 = vsel %vm464, %v457, %v461
          %v466 = vand.u32 2147483647, %v455
          %vm467 = vcmp.eq.f32.partialorder %v466, 8.507059e+37
          %v468 = vand.u32 %v455, 2147483648
          %v469 = vor.u32 1.1754944e-38, %v468
          %v470 = vsel %vm467, %v469, %v465
          %v471 = vmul.f32 1.0, %v470
          %v472 = vrcp.pop %v456
          %v473 = vmul.f32 %v456, %v472
          %v474 = vsub.f32 1.0, %v473
          %v475 = vmul.f32 %v472, %v474
          %v476 = vadd.f32 %v472, %v475
          %vm477 = vweird.f32 %v456
          %vm478 = vweird.f32 %v472
          %vm479 = vmor %vm477, %vm478
          %v480 = vsel %vm479, %v472, %v476
          %v481 = vand.u32 2147483647, %v456
          %vm482 = vcmp.eq.f32.partialorder %v481, 8.507059e+37
          %v483 = vand.u32 %v456, 2147483648
          %v484 = vor.u32 1.1754944e-38, %v483
          %v485 = vsel %vm482, %v484, %v480
          %v486 = vmul.f32 1.0, %v485
          %487 = vst.msk [vmem:[#allocation4] sm:$0xff] %vm410, %v471
          %488 = vst.msk [vmem:[#allocation4 + $0x8] sm:$0xff] %vm410, %v486
        $region56: #{tpu_custom_call.1} parent=39 // pred_fallthru
          _
        // Predicated region
        $region57: #{tpu_custom_call.1} parent=39 // pred_check
          %p489 = pneg %p404
        $region58: #{tpu_custom_call.1} parent=39 // pred_check_branch
          %491 = sbr.rel (%p489) target = $region60
        $region59: #{tpu_custom_call.1} parent=39 // pred_region
          %v492 = vld [vmem:[#allocation2] sm:$0xff]
          %v493 = vld [vmem:[#allocation2 + $0x8] sm:$0xff]
          %494 = vmax.xlane.f32.xlu0 %v402
          %v495 = vpop.xlane.xlu0 %494
          %496 = vmax.xlane.f32.xlu0 %v403
          %v497 = vpop.xlane.xlu0 %496
          %v498 = vmax.f32 %v492, %v495
          %v499 = vmax.f32 %v493, %v497
          %v500 = vld [vmem:[#allocation3] sm:$0xff]
          %v501 = vld [vmem:[#allocation3 + $0x8] sm:$0xff]
          %v502 = vsub.f32 %v492, %v498
          %v503 = vsub.f32 %v493, %v499
          %v504 = vmul.f32 %v502, 1.442695
          %v505 = vpow.pop %v504
          %v506 = vmul.f32 %v503, 1.442695
          %v507 = vpow.pop %v506
          %v508 = vmul.f32 %v500, %v505
          %v509 = vmul.f32 %v501, %v507
          %511 = vset.pattern.permute.xlu0 0
          %512 = vperm.xlu0 %511, %v498
          %v513 = vpop.permute.xlu0 %512
          %516 = vset.pattern.permute.xlu0 0
          %517 = vperm.xlu0 %516, %v499
          %v518 = vpop.permute.xlu0 %517
          %v520 = vsub.f32 %v402, %v513
          %v521 = vsub.f32 %v403, %v518
          %v522 = vmul.f32 %v520, 1.442695
          %v523 = vpow.pop %v522
          %v524 = vmul.f32 %v521, 1.442695
          %v525 = vpow.pop %v524
          %526 = vadd.xlane.f32.xlu0 %v523
          %v527 = vpop.xlane.xlu0 %526
          %528 = vadd.xlane.f32.xlu0 %v525
          %v529 = vpop.xlane.xlu0 %528
          %v530 = vadd.f32 %v508, %v527
          %v531 = vadd.f32 %v509, %v529
          %vm532 = vcmask 7168
          %533 = vst.msk [vmem:[#allocation3] sm:$0xff] %vm532, %v530
          %534 = vst.msk [vmem:[#allocation3 + $0x8] sm:$0xff] %vm532, %v531
          %535 = vst.msk [vmem:[#allocation2] sm:$0xff] %vm532, %v498
          %536 = vst.msk [vmem:[#allocation2 + $0x8] sm:$0xff] %vm532, %v499
        $region60: #{tpu_custom_call.1} parent=39 // pred_fallthru
          _
        %p537 = scmp.eq.s32.totalorder %s32, 1
        // Predicated region
        $region61: #{tpu_custom_call.1} parent=39 // pred_check
          %p538 = pneg %p537
        $region62: #{tpu_custom_call.1} parent=39 // pred_check_branch
          %540 = sbr.rel (%p538) target = $region64
        $region63: #{tpu_custom_call.1} parent=39 // pred_region
          %v541 = vld [vmem:[#allocation4] sm:$0xff]
          %v542 = vld [vmem:[#allocation4 + $0x8] sm:$0xff]
          %v543 = vsub.f32 1.0, %v541
          %v544 = vsub.f32 1.0, %v542
          %v545 = vld [vmem:[#allocation3] sm:$0xff]
          %v546 = vld [vmem:[#allocation3 + $0x8] sm:$0xff]
          %v547 = vrcp.pop %v545
          %v548 = vmul.f32 %v545, %v547
          %v549 = vsub.f32 1.0, %v548
          %v550 = vmul.f32 %v547, %v549
          %v551 = vadd.f32 %v547, %v550
          %vm552 = vweird.f32 %v545
          %vm553 = vweird.f32 %v547
          %vm554 = vmor %vm552, %vm553
          %v555 = vsel %vm554, %v547, %v551
          %v556 = vand.u32 2147483647, %v545
          %vm557 = vcmp.eq.f32.partialorder %v556, 8.507059e+37
          %v558 = vand.u32 %v545, 2147483648
          %v559 = vor.u32 1.1754944e-38, %v558
          %v560 = vsel %vm557, %v559, %v555
          %v561 = vmul.f32 %v543, %v560
          %v562 = vrcp.pop %v546
          %v563 = vmul.f32 %v546, %v562
          %v564 = vsub.f32 1.0, %v563
          %v565 = vmul.f32 %v562, %v564
          %v566 = vadd.f32 %v562, %v565
          %vm567 = vweird.f32 %v546
          %vm568 = vweird.f32 %v562
          %vm569 = vmor %vm567, %vm568
          %v570 = vsel %vm569, %v562, %v566
          %v571 = vand.u32 2147483647, %v546
          %vm572 = vcmp.eq.f32.partialorder %v571, 8.507059e+37
          %v573 = vand.u32 %v546, 2147483648
          %v574 = vor.u32 1.1754944e-38, %v573
          %v575 = vsel %vm572, %v574, %v570
          %v576 = vmul.f32 %v544, %v575
          %v577 = vld [vmem:[#allocation2] sm:$0xff]
          %v578 = vld [vmem:[#allocation2 + $0x8] sm:$0xff]
          %580 = vset.pattern.permute.xlu0 0
          %581 = vperm.xlu0 %580, %v577
          %v582 = vpop.permute.xlu0 %581
          %585 = vset.pattern.permute.xlu0 0
          %586 = vperm.xlu0 %585, %v578
          %v587 = vpop.permute.xlu0 %586
          %v589 = vsub.f32 %v402, %v582
          %v590 = vsub.f32 %v403, %v587
          %v591 = vmul.f32 %v589, 1.442695
          %v592 = vpow.pop %v591
          %v593 = vmul.f32 %v590, 1.442695
          %v594 = vpow.pop %v593
          %596 = vset.pattern.permute.xlu0 0
          %597 = vperm.xlu0 %596, %v561
          %v598 = vpop.permute.xlu0 %597
          %601 = vset.pattern.permute.xlu0 0
          %602 = vperm.xlu0 %601, %v576
          %v603 = vpop.permute.xlu0 %602
          %v605 = vmul.f32 %v592, %v598
          %v606 = vmul.f32 %v594, %v603
          %607 = vst [vmem:[%s336] sm:$0xff] %v605
          %608 = vst [vmem:[%s336 + $0x8] sm:$0xff] %v606
        $region64: #{tpu_custom_call.1} parent=39 // pred_fallthru
          _
        %s609 = sand.u32 %s177, 1
        %s610 = scalar_lea.sflag [#allocation8], %s609
        %s611 = sand.u32 %s177, 1
        %s612 = smul.addr %s611, 16
        %s613 = scalar_lea.vmem [#allocation12], %s612
        // Predicated region
        $region65: #{tpu_custom_call.1} parent=39 // pred_check
          %p614 = pneg %p187
        $region66: #{tpu_custom_call.1} parent=39 // pred_check_branch
          %616 = sbr.rel (%p614) target = $region68
        $region67: #{tpu_custom_call.1} parent=39 // pred_region
          %s617 = smul.u32 %s33, %s32
          %s618 = smul.u32 2, %s31
          %620 = vsyncadd %s610, 0
          %s621 = smul.addr %s618, 2
          %s622 = sadd.s32 %s617, %s621
          %s623 = smul.addr %s622, 8
          %s624 = scalar_lea.hbm %s5, %s623
          %s625 = sshll.u32 %s613, 4
          %s626 = int_to_ptr.vmem [resolvable:$true] %s625
          %s627 = sshll.u32 %s624, 4
          %s628 = int_to_ptr.hbm [resolvable:$true] %s627
          %633 = dma.vmem_to_hbm [thread:$0]  %s626, 256, %s628, %s610, 128, 256, 8
        $region68: #{tpu_custom_call.1} parent=39 // pred_fallthru
          _
      $region40: #{tpu_custom_call.1} parent=5 // pred_fallthru
        _
      %p634 = scmp.le.s32.totalorder 2, %s21
      // Predicated region
      $region69: #{tpu_custom_call.1} parent=5 // pred_check
        %p635 = pneg %p634
      $region70: #{tpu_custom_call.1} parent=5 // pred_check_branch
        %637 = sbr.rel (%p635) target = $region72
      $region71: #{tpu_custom_call.1} parent=5 // pred_region
        %s638 = ssub.s32 %s21, 2
        // Predicated region
        $region73: #{tpu_custom_call.1} parent=71 // pred_check
          %p639 = pneg %p193
        $region74: #{tpu_custom_call.1} parent=71 // pred_check_branch
          %641 = sbr.rel (%p639) target = $region76
        $region75: #{tpu_custom_call.1} parent=71 // pred_region
          %s642 = sand.u32 %s178, 1
          %s643 = scalar_lea.sflag [#allocation8], %s642
          %s644 = sand.u32 %s178, 1
          %s645 = smul.addr %s644, 16
          %s646 = scalar_lea.vmem [#allocation12], %s645
          %648 = dma.done %s643, 256
        $region76: #{tpu_custom_call.1} parent=71 // pred_fallthru
          _
      $region72: #{tpu_custom_call.1} parent=5 // pred_fallthru
        _
    $region6: #{tpu_custom_call.1} parent=1 // loop_footer
      %s25 = sadd.s32 1, %s21
    $region7: #{tpu_custom_call.1} parent=1 // loop_footer_branch
      %20 = sbr.rel target = $region3
    $region8: #{tpu_custom_call.1} parent=1 // loop_exit
      _
    %649 = vsyncpa [#allocation7], 1
    %s650 = scalar_lea.sflag [#allocation7], 1
    %651 = vsyncpa %s650, 1
    %652 = vsyncpa [#allocation10], 1
    %s653 = scalar_lea.sflag [#allocation10], 1
    %654 = vsyncpa %s653, 1
    %655 = vsyncpa [#allocation8], 1
    %s656 = scalar_lea.sflag [#allocation8], 1
    %657 = vsyncpa %s656, 1

</llo_original>
